<compile_context>
chip_gen: v6e
topology: v6e:2x2x1
jax: 0.10.0
libtpu: 0.0.40
codegen_flags: <defaults>
</compile_context>

<pallas_src>
import functools

import jax
import jax.numpy as jnp
from jax.experimental import pallas as pl
from jax.experimental.pallas import tpu as pltpu

HID1, HID2 = 256, 128


def _round_up(n, m):
    return ((n + m - 1) // m) * m


def _choose_tm(n, tm):
    # Tile rows: multiple of 16 (packed-bf16 sublane granularity), at most ceil(N/2)
    # rounded up so the grid has >= 2 steps when N allows (keeps both v7x TCs busy),
    # capped by the requested tm.
    half = _round_up(max(-(-n // 2), 16), 16)
    return max(16, min(tm, half))


def _mlp_kernel(x_ref, w1_ref, b1_ref, w2_ref, b2_ref, w3_ref, b3_ref, o_ref):
    # Fused hot path: 3 MXU matmuls (bf16 in, f32 accumulate) + bias adds + ReLUs.
    # Dropout(0.1) is identity in eval-mode forward semantics, so it is elided.
    x = x_ref[...].astype(jnp.bfloat16)  # in-kernel cast; hides under the MXU
    h1 = jnp.dot(x, w1_ref[...], preferred_element_type=jnp.float32) + b1_ref[...]
    h1 = jnp.maximum(h1, 0.0).astype(jnp.bfloat16)
    h2 = jnp.dot(h1, w2_ref[...], preferred_element_type=jnp.float32) + b2_ref[...]
    h2 = jnp.maximum(h2, 0.0).astype(jnp.bfloat16)
    out = jnp.dot(h2, w3_ref[...], preferred_element_type=jnp.float32) + b3_ref[...]
    o_ref[...] = out.astype(o_ref.dtype)


def prepare_params(params):
    """One-time layout prep: bf16 weights (MXU operands), f32 biases (added to f32 acc).

    Call once outside the hot loop so no per-call convert ops remain.
    """
    w1, b1, w2, b2, w3, b3 = params
    return (w1.astype(jnp.bfloat16), b1,
            w2.astype(jnp.bfloat16), b2,
            w3.astype(jnp.bfloat16), b3)


@functools.partial(jax.jit, static_argnames=("tm",))
def torch_umap_forward(x, kernel_params, *, tm=2048):
    """Pallas forward of TorchUMAP.encoder.

    x: (N, D) float32.  kernel_params: output of prepare_params (bf16 weights stored
    as (in, out), f32 biases stored as (1, out)).  Returns (N, out_dim) float32.
    """
    w1, b1, w2, b2, w3, b3 = kernel_params
    N, D = x.shape
    out_dim = w3.shape[1]

    tm_eff = _choose_tm(N, tm)
    grid = (pl.cdiv(N, tm_eff),)

    return pl.pallas_call(
        _mlp_kernel,
        out_shape=jax.ShapeDtypeStruct((N, out_dim), x.dtype),
        grid_spec=pl.GridSpec(
            grid=grid,
            in_specs=[
                pl.BlockSpec((tm_eff, D), lambda i: (i, 0)),       # x tile (streamed, f32)
                pl.BlockSpec((D, HID1), lambda i: (0, 0)),         # W1 (resident, bf16)
                pl.BlockSpec((1, HID1), lambda i: (0, 0)),         # b1 (f32)
                pl.BlockSpec((HID1, HID2), lambda i: (0, 0)),      # W2 (resident, bf16)
                pl.BlockSpec((1, HID2), lambda i: (0, 0)),         # b2 (f32)
                pl.BlockSpec((HID2, out_dim), lambda i: (0, 0)),   # W3 (resident, bf16)
                pl.BlockSpec((1, out_dim), lambda i: (0, 0)),      # b3 (f32)
            ],
            # Narrow-lane output block is legal: last block dim == full array dim.
            out_specs=pl.BlockSpec((tm_eff, out_dim), lambda i: (i, 0)),
        ),
        compiler_params=pltpu.CompilerParams(
            dimension_semantics=("parallel",),
            vmem_limit_bytes=32 << 20,   # explicit: v5e default scoped VMEM is only 16 MiB
        ),
    )(x, w1, b1, w2, b2, w3, b3)


def init_params(key, input_dim, output_dim):
    """Deterministic init mimicking nn.Linear shapes (stored as (in, out)), f32."""
    ks = jax.random.split(key, 6)

    def lin(kw, kb, fan_in, fan_out):
        bound = 1.0 / jnp.sqrt(fan_in)
        w = jax.random.uniform(kw, (fan_in, fan_out), jnp.float32, -bound, bound)
        b = jax.random.uniform(kb, (1, fan_out), jnp.float32, -bound, bound)
        return w, b

    w1, b1 = lin(ks[0], ks[1], input_dim, HID1)
    w2, b2 = lin(ks[2], ks[3], HID1, HID2)
    w3, b3 = lin(ks[4], ks[5], HID2, output_dim)
    return (w1, b1, w2, b2, w3, b3)


def reference_forward_f32(x, params):
    """Pure-f32 reference of the original module's eval-mode forward."""
    w1, b1, w2, b2, w3, b3 = params
    h1 = jnp.maximum(x @ w1 + b1, 0.0)
    h2 = jnp.maximum(h1 @ w2 + b2, 0.0)
    return h2 @ w3 + b3


def reference_forward_bf16(x, params):
    """Reference matching the kernel's bf16-operand / f32-accumulate arithmetic."""
    w1, b1, w2, b2, w3, b3 = params
    bf = jnp.bfloat16
    h1 = jnp.dot(x.astype(bf), w1.astype(bf), preferred_element_type=jnp.float32) + b1
    h1 = jnp.maximum(h1, 0.0).astype(bf)
    h2 = jnp.dot(h1, w2.astype(bf), preferred_element_type=jnp.float32) + b2
    h2 = jnp.maximum(h2, 0.0).astype(bf)
    return jnp.dot(h2, w3.astype(bf), preferred_element_type=jnp.float32) + b3


if __name__ == "__main__":
    key = jax.random.PRNGKey(0)
    k_x, k_p = jax.random.split(key)

    batch, input_dim, output_dim = 64, 32, 10
    x = jax.random.normal(k_x, (batch, input_dim), dtype=jnp.float32)
    params = init_params(k_p, input_dim, output_dim)
    kparams = prepare_params(params)   # one-time bf16 weight prep, outside the hot path

    out = torch_umap_forward(x, kparams)
    out = jax.block_until_ready(out)
    assert out.shape == (batch, output_dim)

    # Tight check vs a reference using the same bf16/f32-accumulate arithmetic.
    ref_bf16 = reference_forward_bf16(x, params)
    assert jnp.allclose(out, ref_bf16, atol=2e-3, rtol=2e-3), "mismatch vs bf16 reference"

    # Loose semantic check vs the pure-f32 module forward (bf16 rounding only).
    ref_f32 = reference_forward_f32(x, params)
    assert jnp.allclose(out, ref_f32, atol=5e-2, rtol=5e-2), "mismatch vs f32 reference"

    print("KERNEL_OK")
</pallas_src>

<mosaic_0001>
module attributes {stable_mosaic.version = 11 : i64} {
  func.func @_mlp_kernel(%arg0: i32, %arg1: memref<32x32xf32, #tpu.memory_space<vmem>>, %arg2: memref<32x256xbf16, #tpu.memory_space<vmem>>, %arg3: memref<1x256xf32, #tpu.memory_space<vmem>>, %arg4: memref<256x128xbf16, #tpu.memory_space<vmem>>, %arg5: memref<1x128xf32, #tpu.memory_space<vmem>>, %arg6: memref<128x10xbf16, #tpu.memory_space<vmem>>, %arg7: memref<1x10xf32, #tpu.memory_space<vmem>>, %arg8: memref<32x10xf32, #tpu.memory_space<vmem>>) attributes {dimension_semantics = [#tpu.dimension_semantics<parallel>], iteration_bounds = array<i64: 2>, scalar_prefetch = 0 : i64, scratch_operands = 0 : i64, tpu.core_type = #tpu.core_type<tc>, window_params = [{transform_indices = @transform_0, window_bounds = array<i64: 32, 32>}, {pipeline_mode = #tpu.pipeline_mode<synchronous>, transform_indices = @transform_1, window_bounds = array<i64: 32, 256>}, {pipeline_mode = #tpu.pipeline_mode<synchronous>, transform_indices = @transform_2, window_bounds = array<i64: 1, 256>}, {pipeline_mode = #tpu.pipeline_mode<synchronous>, transform_indices = @transform_3, window_bounds = array<i64: 256, 128>}, {pipeline_mode = #tpu.pipeline_mode<synchronous>, transform_indices = @transform_4, window_bounds = array<i64: 1, 128>}, {pipeline_mode = #tpu.pipeline_mode<synchronous>, transform_indices = @transform_5, window_bounds = array<i64: 128, 10>}, {pipeline_mode = #tpu.pipeline_mode<synchronous>, transform_indices = @transform_6, window_bounds = array<i64: 1, 10>}, {transform_indices = @transform_7, window_bounds = array<i64: 32, 10>}]} {
    %c0 = arith.constant 0 : index
    %c0_0 = arith.constant 0 : index
    %0 = vector.load %arg1[%c0, %c0_0] : memref<32x32xf32, #tpu.memory_space<vmem>>, vector<32x32xf32>
    %1 = arith.truncf %0 : vector<32x32xf32> to vector<32x32xbf16>
    %c0_1 = arith.constant 0 : index
    %c0_2 = arith.constant 0 : index
    %2 = vector.load %arg2[%c0_1, %c0_2] : memref<32x256xbf16, #tpu.memory_space<vmem>>, vector<32x256xbf16>
    %cst = arith.constant dense<0.000000e+00> : vector<32x256xf32>
    %3 = tpu.matmul %1, %2, %cst {dimension_numbers = #tpu.dot_dimension_numbers<[1], [0], [0], [1], [0, 0, 1, 1], [], []>} : vector<32x32xbf16>, vector<32x256xbf16>, vector<32x256xf32> -> vector<32x256xf32>
    %c0_3 = arith.constant 0 : index
    %c0_4 = arith.constant 0 : index
    %4 = vector.load %arg3[%c0_3, %c0_4] : memref<1x256xf32, #tpu.memory_space<vmem>>, vector<1x256xf32>
    %5 = vector.broadcast %4 : vector<1x256xf32> to vector<32x256xf32>
    %6 = arith.addf %3, %5 : vector<32x256xf32>
    %cst_5 = arith.constant 0.000000e+00 : f32
    %7 = vector.broadcast %cst_5 : f32 to vector<32x256xf32>
    %8 = arith.maximumf %6, %7 : vector<32x256xf32>
    %9 = arith.truncf %8 : vector<32x256xf32> to vector<32x256xbf16>
    %c0_6 = arith.constant 0 : index
    %c0_7 = arith.constant 0 : index
    %10 = vector.load %arg4[%c0_6, %c0_7] : memref<256x128xbf16, #tpu.memory_space<vmem>>, vector<256x128xbf16>
    %cst_8 = arith.constant dense<0.000000e+00> : vector<32x128xf32>
    %11 = tpu.matmul %9, %10, %cst_8 {dimension_numbers = #tpu.dot_dimension_numbers<[1], [0], [0], [1], [0, 0, 1, 1], [], []>} : vector<32x256xbf16>, vector<256x128xbf16>, vector<32x128xf32> -> vector<32x128xf32>
    %c0_9 = arith.constant 0 : index
    %c0_10 = arith.constant 0 : index
    %12 = vector.load %arg5[%c0_9, %c0_10] : memref<1x128xf32, #tpu.memory_space<vmem>>, vector<1x128xf32>
    %13 = vector.broadcast %12 : vector<1x128xf32> to vector<32x128xf32>
    %14 = arith.addf %11, %13 : vector<32x128xf32>
    %cst_11 = arith.constant 0.000000e+00 : f32
    %15 = vector.broadcast %cst_11 : f32 to vector<32x128xf32>
    %16 = arith.maximumf %14, %15 : vector<32x128xf32>
    %17 = arith.truncf %16 : vector<32x128xf32> to vector<32x128xbf16>
    %c0_12 = arith.constant 0 : index
    %c0_13 = arith.constant 0 : index
    %18 = vector.load %arg6[%c0_12, %c0_13] : memref<128x10xbf16, #tpu.memory_space<vmem>>, vector<128x10xbf16>
    %cst_14 = arith.constant dense<0.000000e+00> : vector<32x10xf32>
    %19 = tpu.matmul %17, %18, %cst_14 {dimension_numbers = #tpu.dot_dimension_numbers<[1], [0], [0], [1], [0, 0, 1, 1], [], []>} : vector<32x128xbf16>, vector<128x10xbf16>, vector<32x10xf32> -> vector<32x10xf32>
    %c0_15 = arith.constant 0 : index
    %c0_16 = arith.constant 0 : index
    %20 = vector.load %arg7[%c0_15, %c0_16] : memref<1x10xf32, #tpu.memory_space<vmem>>, vector<1x10xf32>
    %21 = vector.broadcast %20 : vector<1x10xf32> to vector<32x10xf32>
    %22 = arith.addf %19, %21 : vector<32x10xf32>
    %c0_17 = arith.constant 0 : index
    %c0_18 = arith.constant 0 : index
    %23 = vector.load %arg8[%c0_17, %c0_18] : memref<32x10xf32, #tpu.memory_space<vmem>>, vector<32x10xf32>
    tpu.vector_store %arg8[%c0_17, %c0_18], %22 {strides = array<i32>} : memref<32x10xf32, #tpu.memory_space<vmem>>, vector<32x10xf32>,
    return
  }
  func.func @transform_0(%arg0: i32) -> (i32, i32) {
    %c0_i32 = arith.constant 0 : i32
    %c0_i32_0 = arith.constant 0 : i32
    return %arg0, %c0_i32 : i32, i32
  }
  func.func @transform_1(%arg0: i32) -> (i32, i32) {
    %c0_i32 = arith.constant 0 : i32
    %c0_i32_0 = arith.constant 0 : i32
    %c0_i32_1 = arith.constant 0 : i32
    return %c0_i32, %c0_i32_0 : i32, i32
  }
  func.func @transform_2(%arg0: i32) -> (i32, i32) {
    %c0_i32 = arith.constant 0 : i32
    %c0_i32_0 = arith.constant 0 : i32
    %c0_i32_1 = arith.constant 0 : i32
    return %c0_i32, %c0_i32_0 : i32, i32
  }
  func.func @transform_3(%arg0: i32) -> (i32, i32) {
    %c0_i32 = arith.constant 0 : i32
    %c0_i32_0 = arith.constant 0 : i32
    %c0_i32_1 = arith.constant 0 : i32
    return %c0_i32, %c0_i32_0 : i32, i32
  }
  func.func @transform_4(%arg0: i32) -> (i32, i32) {
    %c0_i32 = arith.constant 0 : i32
    %c0_i32_0 = arith.constant 0 : i32
    %c0_i32_1 = arith.constant 0 : i32
    return %c0_i32, %c0_i32_0 : i32, i32
  }
  func.func @transform_5(%arg0: i32) -> (i32, i32) {
    %c0_i32 = arith.constant 0 : i32
    %c0_i32_0 = arith.constant 0 : i32
    %c0_i32_1 = arith.constant 0 : i32
    return %c0_i32, %c0_i32_0 : i32, i32
  }
  func.func @transform_6(%arg0: i32) -> (i32, i32) {
    %c0_i32 = arith.constant 0 : i32
    %c0_i32_0 = arith.constant 0 : i32
    %c0_i32_1 = arith.constant 0 : i32
    return %c0_i32, %c0_i32_0 : i32, i32
  }
  func.func @transform_7(%arg0: i32) -> (i32, i32) {
    %c0_i32 = arith.constant 0 : i32
    %c0_i32_0 = arith.constant 0 : i32
    return %arg0, %c0_i32 : i32, i32
  }
}

</mosaic_0001>

<llo_original>
// kernel: torch_umap_forward.1
$region0: #{torch_umap_forward.1}
  #allocation0 [shape = 'u32[]', space=smem, size = 0x4, offset = 0x4, fixed_abs, tag = 'smem constant byte address 0x4 - core index']
  #allocation1 [shape = 'u32[144,128]{1,0:T(1,128)}', space=vmem, size = 0x12000, scoped, tag = 'internal scratch']
  %s0 = inlined_call_operand.vmem [shape: f32[64,32], index: 0, kind: input, shape index: {}]
  %s1 = inlined_call_operand.vmem [shape: bf16[32,256], index: 1, kind: input, shape index: {}]
  %s2 = inlined_call_operand.vmem [shape: f32[1,256], index: 2, kind: input, shape index: {}]
  %s3 = inlined_call_operand.vmem [shape: bf16[256,128], index: 3, kind: input, shape index: {}]
  %s4 = inlined_call_operand.vmem [shape: f32[1,128], index: 4, kind: input, shape index: {}]
  %s5 = inlined_call_operand.vmem [shape: bf16[128,10], index: 5, kind: input, shape index: {}]
  %s6 = inlined_call_operand.vmem [shape: f32[1,10], index: 6, kind: input, shape index: {}]
  %s7 = inlined_call_operand.vmem [shape: f32[64,10], index: 7, kind: output, shape index: {}]
  %s8 = sld [smem:[#allocation0]]
  $region61: #{torch_umap_forward.1} parent=0
    _
  %s10 = ssub.s32 1, %s8
  %s11 = scalar_select 0, %s10, %s8
  loop: start=0, step=1, limit=4
  $region2: #{torch_umap_forward.1} parent=0 // loop_pre_header
    _
  $region3: #{torch_umap_forward.1} parent=0 // loop_header
    %s13 = sphi 0, %s17
    %p14 = scmp.ge.s32.totalorder %s13, 4
    %s23 = sphi 0, %s25
    %s26 = sphi 0, %s23
    %s27 = sphi 0, %s26
    %s43 = sphi 0, %s27
    %s47 = sphi 0, %s47
    %s49 = sphi 0, %s47
    %s50 = sphi 0, %s49
    %s64 = sphi 0, %s50
    %s68 = sphi 0, %s68
    %s70 = sphi 0, %s68
    %s71 = sphi 0, %s70
    %s85 = sphi 0, %s71
    %s89 = sphi 0, %s89
    %s91 = sphi 0, %s89
    %s92 = sphi 0, %s91
    %s106 = sphi 0, %s92
    %s110 = sphi 0, %s110
    %s112 = sphi 0, %s110
    %s113 = sphi 0, %s112
    %s127 = sphi 0, %s113
    %s131 = sphi 0, %s131
    %s133 = sphi 0, %s131
    %s134 = sphi 0, %s133
    %s148 = sphi 0, %s134
    %s152 = sphi 0, %s152
    %s154 = sphi 0, %s152
    %s155 = sphi 0, %s154
    %s169 = sphi 0, %s155
    %s175 = sphi 0, %s177
    %s178 = sphi 0, %s175
    %s179 = sphi 0, %s178
    %s195 = sphi 0, %s179
  $region4: #{torch_umap_forward.1} parent=0 // loop_header_branch
    %16 = sbr.rel (%p14) target = $region8
  $region5: #{torch_umap_forward.1} parent=0 // loop_body
    %s18 = ssub.s32 %s13, 1
    %s19 = ssub.s32 %s13, 2
    %s20 = sadd.s32 %s13, 1
    %s21 = ssub.s32 %s13, %s20
    %p22 = scmp.eq.s32.totalorder %s21, 0
    %s24 = sadd.s32 %s23, 1
    %s25 = scalar_select %p22, %s23, %s24
    %p28 = pneg %p22
    %p29 = scmp.eq.s32.totalorder %s13, 1
    %p30 = por %p28, %p29
    %p31 = scmp.ne.s32.totalorder %s23, %s26
    %p32 = scmp.eq.s32.totalorder %s13, 0
    %p33 = por %p31, %p32
    %p34 = scmp.ne.s32.totalorder %s23, %s26
    %p35 = scmp.eq.s32.totalorder %s18, 1
    %p36 = por %p34, %p35
    %p37 = scmp.ne.s32.totalorder %s26, %s27
    %p38 = scmp.eq.s32.totalorder %s18, 0
    %p39 = por %p37, %p38
    %p40 = scmp.ne.s32.totalorder %s26, %s27
    %p41 = scmp.eq.s32.totalorder %s19, 1
    %p42 = por %p40, %p41
    %p44 = scmp.ne.s32.totalorder %s27, %s43
    %p45 = scmp.eq.s32.totalorder %s19, 0
    %p46 = por %p44, %p45
    %s48 = sadd.s32 %s47, 1
    %p51 = scmp.eq.s32.totalorder %s13, 1
    %p52 = scmp.ne.s32.totalorder %s47, %s49
    %p53 = scmp.eq.s32.totalorder %s13, 0
    %p54 = por %p52, %p53
    %p55 = scmp.ne.s32.totalorder %s47, %s49
    %p56 = scmp.eq.s32.totalorder %s18, 1
    %p57 = por %p55, %p56
    %p58 = scmp.ne.s32.totalorder %s49, %s50
    %p59 = scmp.eq.s32.totalorder %s18, 0
    %p60 = por %p58, %p59
    %p61 = scmp.ne.s32.totalorder %s49, %s50
    %p62 = scmp.eq.s32.totalorder %s19, 1
    %p63 = por %p61, %p62
    %p65 = scmp.ne.s32.totalorder %s50, %s64
    %p66 = scmp.eq.s32.totalorder %s19, 0
    %p67 = por %p65, %p66
    %s69 = sadd.s32 %s68, 1
    %p72 = scmp.eq.s32.totalorder %s13, 1
    %p73 = scmp.ne.s32.totalorder %s68, %s70
    %p74 = scmp.eq.s32.totalorder %s13, 0
    %p75 = por %p73, %p74
    %p76 = scmp.ne.s32.totalorder %s68, %s70
    %p77 = scmp.eq.s32.totalorder %s18, 1
    %p78 = por %p76, %p77
    %p79 = scmp.ne.s32.totalorder %s70, %s71
    %p80 = scmp.eq.s32.totalorder %s18, 0
    %p81 = por %p79, %p80
    %p82 = scmp.ne.s32.totalorder %s70, %s71
    %p83 = scmp.eq.s32.totalorder %s19, 1
    %p84 = por %p82, %p83
    %p86 = scmp.ne.s32.totalorder %s71, %s85
    %p87 = scmp.eq.s32.totalorder %s19, 0
    %p88 = por %p86, %p87
    %s90 = sadd.s32 %s89, 1
    %p93 = scmp.eq.s32.totalorder %s13, 1
    %p94 = scmp.ne.s32.totalorder %s89, %s91
    %p95 = scmp.eq.s32.totalorder %s13, 0
    %p96 = por %p94, %p95
    %p97 = scmp.ne.s32.totalorder %s89, %s91
    %p98 = scmp.eq.s32.totalorder %s18, 1
    %p99 = por %p97, %p98
    %p100 = scmp.ne.s32.totalorder %s91, %s92
    %p101 = scmp.eq.s32.totalorder %s18, 0
    %p102 = por %p100, %p101
    %p103 = scmp.ne.s32.totalorder %s91, %s92
    %p104 = scmp.eq.s32.totalorder %s19, 1
    %p105 = por %p103, %p104
    %p107 = scmp.ne.s32.totalorder %s92, %s106
    %p108 = scmp.eq.s32.totalorder %s19, 0
    %p109 = por %p107, %p108
    %s111 = sadd.s32 %s110, 1
    %p114 = scmp.eq.s32.totalorder %s13, 1
    %p115 = scmp.ne.s32.totalorder %s110, %s112
    %p116 = scmp.eq.s32.totalorder %s13, 0
    %p117 = por %p115, %p116
    %p118 = scmp.ne.s32.totalorder %s110, %s112
    %p119 = scmp.eq.s32.totalorder %s18, 1
    %p120 = por %p118, %p119
    %p121 = scmp.ne.s32.totalorder %s112, %s113
    %p122 = scmp.eq.s32.totalorder %s18, 0
    %p123 = por %p121, %p122
    %p124 = scmp.ne.s32.totalorder %s112, %s113
    %p125 = scmp.eq.s32.totalorder %s19, 1
    %p126 = por %p124, %p125
    %p128 = scmp.ne.s32.totalorder %s113, %s127
    %p129 = scmp.eq.s32.totalorder %s19, 0
    %p130 = por %p128, %p129
    %s132 = sadd.s32 %s131, 1
    %p135 = scmp.eq.s32.totalorder %s13, 1
    %p136 = scmp.ne.s32.totalorder %s131, %s133
    %p137 = scmp.eq.s32.totalorder %s13, 0
    %p138 = por %p136, %p137
    %p139 = scmp.ne.s32.totalorder %s131, %s133
    %p140 = scmp.eq.s32.totalorder %s18, 1
    %p141 = por %p139, %p140
    %p142 = scmp.ne.s32.totalorder %s133, %s134
    %p143 = scmp.eq.s32.totalorder %s18, 0
    %p144 = por %p142, %p143
    %p145 = scmp.ne.s32.totalorder %s133, %s134
    %p146 = scmp.eq.s32.totalorder %s19, 1
    %p147 = por %p145, %p146
    %p149 = scmp.ne.s32.totalorder %s134, %s148
    %p150 = scmp.eq.s32.totalorder %s19, 0
    %p151 = por %p149, %p150
    %s153 = sadd.s32 %s152, 1
    %p156 = scmp.eq.s32.totalorder %s13, 1
    %p157 = scmp.ne.s32.totalorder %s152, %s154
    %p158 = scmp.eq.s32.totalorder %s13, 0
    %p159 = por %p157, %p158
    %p160 = scmp.ne.s32.totalorder %s152, %s154
    %p161 = scmp.eq.s32.totalorder %s18, 1
    %p162 = por %p160, %p161
    %p163 = scmp.ne.s32.totalorder %s154, %s155
    %p164 = scmp.eq.s32.totalorder %s18, 0
    %p165 = por %p163, %p164
    %p166 = scmp.ne.s32.totalorder %s154, %s155
    %p167 = scmp.eq.s32.totalorder %s19, 1
    %p168 = por %p166, %p167
    %p170 = scmp.ne.s32.totalorder %s155, %s169
    %p171 = scmp.eq.s32.totalorder %s19, 0
    %p172 = por %p170, %p171
    %s173 = ssub.s32 %s13, %s20
    %p174 = scmp.eq.s32.totalorder %s173, 0
    %s176 = sadd.s32 %s175, 1
    %s177 = scalar_select %p174, %s175, %s176
    %p180 = pneg %p174
    %p181 = scmp.eq.s32.totalorder %s13, 1
    %p182 = por %p180, %p181
    %p183 = scmp.ne.s32.totalorder %s175, %s178
    %p184 = scmp.eq.s32.totalorder %s13, 0
    %p185 = por %p183, %p184
    %p186 = scmp.ne.s32.totalorder %s175, %s178
    %p187 = scmp.eq.s32.totalorder %s18, 1
    %p188 = por %p186, %p187
    %p189 = scmp.ne.s32.totalorder %s178, %s179
    %p190 = scmp.eq.s32.totalorder %s18, 0
    %p191 = por %p189, %p190
    %p192 = scmp.ne.s32.totalorder %s178, %s179
    %p193 = scmp.eq.s32.totalorder %s19, 1
    %p194 = por %p192, %p193
    %p196 = scmp.ne.s32.totalorder %s179, %s195
    %p197 = scmp.eq.s32.totalorder %s19, 0
    %p198 = por %p196, %p197
    %p199 = scmp.le.s32.totalorder 1, %s13
    %p200 = scmp.lt.s32.totalorder %s13, 3
    %p201 = pnand %p199, %p200
    %p202 = pneg %p201
    // Predicated region
    $region9: #{torch_umap_forward.1} parent=5 // pred_check
      _
    $region10: #{torch_umap_forward.1} parent=5 // pred_check_branch
      %204 = sbr.rel (%p201) target = $region12
    $region11: #{torch_umap_forward.1} parent=5 // pred_region
      %s205 = ssub.s32 %s13, 1
      // Predicated region
      $region13: #{torch_umap_forward.1} parent=11 // pred_check
        %p206 = pneg %p60
      $region14: #{torch_umap_forward.1} parent=11 // pred_check_branch
        %208 = sbr.rel (%p206) target = $region16
      $region15: #{torch_umap_forward.1} parent=11 // pred_region
        _
      $region16: #{torch_umap_forward.1} parent=11 // pred_fallthru
        _
      // Predicated region
      $region17: #{torch_umap_forward.1} parent=11 // pred_check
        %p209 = pneg %p81
      $region18: #{torch_umap_forward.1} parent=11 // pred_check_branch
        %211 = sbr.rel (%p209) target = $region20
      $region19: #{torch_umap_forward.1} parent=11 // pred_region
        _
      $region20: #{torch_umap_forward.1} parent=11 // pred_fallthru
        _
      // Predicated region
      $region21: #{torch_umap_forward.1} parent=11 // pred_check
        %p212 = pneg %p102
      $region22: #{torch_umap_forward.1} parent=11 // pred_check_branch
        %214 = sbr.rel (%p212) target = $region24
      $region23: #{torch_umap_forward.1} parent=11 // pred_region
        _
      $region24: #{torch_umap_forward.1} parent=11 // pred_fallthru
        _
      // Predicated region
      $region25: #{torch_umap_forward.1} parent=11 // pred_check
        %p215 = pneg %p123
      $region26: #{torch_umap_forward.1} parent=11 // pred_check_branch
        %217 = sbr.rel (%p215) target = $region28
      $region27: #{torch_umap_forward.1} parent=11 // pred_region
        _
      $region28: #{torch_umap_forward.1} parent=11 // pred_fallthru
        _
      // Predicated region
      $region29: #{torch_umap_forward.1} parent=11 // pred_check
        %p218 = pneg %p144
      $region30: #{torch_umap_forward.1} parent=11 // pred_check_branch
        %220 = sbr.rel (%p218) target = $region32
      $region31: #{torch_umap_forward.1} parent=11 // pred_region
        _
      $region32: #{torch_umap_forward.1} parent=11 // pred_fallthru
        _
      // Predicated region
      $region33: #{torch_umap_forward.1} parent=11 // pred_check
        %p221 = pneg %p165
      $region34: #{torch_umap_forward.1} parent=11 // pred_check_branch
        %223 = sbr.rel (%p221) target = $region36
      $region35: #{torch_umap_forward.1} parent=11 // pred_region
        _
      $region36: #{torch_umap_forward.1} parent=11 // pred_fallthru
        _
    $region12: #{torch_umap_forward.1} parent=5 // pred_fallthru
      _
    %p224 = scmp.lt.s32.totalorder %s13, 2
    // Predicated region
    $region37: #{torch_umap_forward.1} parent=5 // pred_check
      %p225 = pneg %p224
    $region38: #{torch_umap_forward.1} parent=5 // pred_check_branch
      %227 = sbr.rel (%p225) target = $region40
    $region39: #{torch_umap_forward.1} parent=5 // pred_region
      // Predicated region
      $region41: #{torch_umap_forward.1} parent=39 // pred_check
        %p228 = pneg %p33
      $region42: #{torch_umap_forward.1} parent=39 // pred_check_branch
        %230 = sbr.rel (%p228) target = $region44
      $region43: #{torch_umap_forward.1} parent=39 // pred_region
        %s231 = smul.u32 4, %s13
        %p232 = scmp.lt.s32.totalorder %s231, 7
        %s233 = scalar_select %p232, %s231, 7
        %s234 = smul.addr %s233, 8
        %s235 = scalar_lea.vmem %s0, %s234
        %s236 = smul.u32 4, %s13
      $region44: #{torch_umap_forward.1} parent=39 // pred_fallthru
        _
    $region40: #{torch_umap_forward.1} parent=5 // pred_fallthru
      _
    %p237 = scmp.le.s32.totalorder 1, %s13
    %p238 = scmp.lt.s32.totalorder %s13, 3
    %p239 = pnand %p237, %p238
    %p240 = pneg %p239
    // Predicated region
    $region45: #{torch_umap_forward.1} parent=5 // pred_check
      _
    $region46: #{torch_umap_forward.1} parent=5 // pred_check_branch
      %242 = sbr.rel (%p239) target = $region48
    $region47: #{torch_umap_forward.1} parent=5 // pred_region
      %s243 = ssub.s32 %s13, 1
      %s244 = smul.u32 4, %s18
      %p245 = scmp.lt.s32.totalorder %s244, 7
      %s246 = scalar_select %p245, %s244, 7
      %s247 = smul.addr %s246, 8
      %s248 = scalar_lea.vmem %s0, %s247
      %p249 = pneg %p39
      %p250 = pneg %p36
      %p251 = pneg %p60
      %p252 = pneg %p57
      %p253 = pneg %p81
      %p254 = pneg %p78
      %p255 = pneg %p102
      %p256 = pneg %p99
      %p257 = pneg %p123
      %p258 = pneg %p120
      %p259 = pneg %p144
      %p260 = pneg %p141
      %p261 = pneg %p165
      %p262 = pneg %p162
      %p263 = pneg %p191
      %p264 = pneg %p188
      %s265 = smul.u32 4, %s18
      %p266 = scmp.lt.s32.totalorder %s265, 7
      %s267 = scalar_select %p266, %s265, 7
      %s268 = smul.addr %s267, 8
      %s269 = scalar_lea.vmem %s7, %s268
      %s270 = smul.u32 4, %s18
      %p271 = scmp.lt.s32.totalorder %s270, 7
      %s272 = scalar_select %p271, %s270, 7
      %s273 = smul.addr %s272, 8
      %s274 = scalar_lea.vmem %s0, %s273
      %s275 = smul.u32 4, %s18
      %s276 = smul.u32 4, %s18
      %p277 = scmp.lt.s32.totalorder %s276, 7
      %s278 = scalar_select %p277, %s276, 7
      %s279 = smul.addr %s278, 8
      %s280 = scalar_lea.vmem %s7, %s279
      %s281 = smul.u32 4, %s18
      %v283 = vld [vmem:[%s274] sm:$0xff]
      %v284 = vld [vmem:[%s274 + $0x8] sm:$0xff]
      %v285 = vld [vmem:[%s274 + $0x10] sm:$0xff]
      %v286 = vld [vmem:[%s274 + $0x18] sm:$0xff]
      %v287 = vpack.c.bf16 %v284, %v283
      %v288 = vpack.c.bf16 %v286, %v285
      %v289 = vld [vmem:[%s1] sm:$0xff]
      %v290 = vld [vmem:[%s1 + $0x8] sm:$0xff]
      %v291 = vld [vmem:[%s1 + $0x10] sm:$0xff]
      %v292 = vld [vmem:[%s1 + $0x18] sm:$0xff]
      %v293 = vld [vmem:[%s2] sm:$0x3]
      %v295 = vlaneseq
      %v296 = vshrl.u32 %v295, 7
      %v297 = vsub.s32 0, %v296
      %v298 = vrot.slane %v293, %v297
      %v299 = vlaneseq
      %v300 = vshrl.u32 %v299, 7
      %v301 = vsub.s32 1, %v300
      %v302 = vrot.slane %v293, %v301
      %v309 = vunpack.c.l.b16 %v289
      %v310 = vunpack.c.h.b16 %v289
      %v311 = vunpack.c.l.b16 %v290
      %v312 = vunpack.c.h.b16 %v290
      %v313 = vunpack.c.l.b16 %v291
      %v314 = vunpack.c.h.b16 %v291
      %v315 = vunpack.c.l.b16 %v292
      %v316 = vunpack.c.h.b16 %v292
      %v317 = vpack.c.b16 %v311, %v309
      %v318 = vpack.c.b16 %v312, %v310
      %v319 = vpack.c.b16 %v315, %v313
      %v320 = vpack.c.b16 %v316, %v314
      %vm325 = vcmask 261120
      %v327 = vsel %vm325, %v287, 0
      %v330 = vsel %vm325, %v288, 0
      %332 = vmatprep.subr.bf16.mxu0 0
      %333 = vmatpush1.bf16.msra.mxu0 0
      %334 = vmatprep.subr.bf16.mxu0 0
      %335 = vmatpush1.bf16.msra.mxu0 0
      %336 = vmatprep.subr.bf16.mxu0 0
      %337 = vmatpush1.bf16.msra.mxu0 0
      %338 = vmatprep.subr.bf16.mxu0 0
      %339 = vmatpush1.bf16.msra.mxu0 0
      %340 = vmatprep.subr.bf16.mxu0 0
      %341 = vmatpush1.bf16.msra.mxu0 0
      %342 = vmatprep.subr.bf16.mxu0 0
      %343 = vmatpush1.bf16.msra.mxu0 0
      %344 = vmatprep.subr.bf16.mxu0 %v320
      %345 = vmatpush1.bf16.msra.mxu0 %v319
      %346 = vmatprep.subr.bf16.mxu0 %v318
      %347 = vmatpush1.bf16.msra.mxu0 %v317
      %348 = vmatprep.subr.bf16.mxu0 0
      %349 = vmatpush2.bf16.msra.mxu0 0
      %350 = vmatprep.subr.bf16.mxu0 0
      %351 = vmatpush2.bf16.msra.mxu0 0
      %352 = vmatprep.subr.bf16.mxu0 0
      %353 = vmatpush2.bf16.msra.mxu0 0
      %354 = vmatprep.subr.bf16.mxu0 0
      %355 = vmatpush2.bf16.msra.mxu0 0
      %356 = vmatprep.subr.bf16.mxu0 0
      %357 = vmatpush2.bf16.msra.mxu0 0
      %358 = vmatprep.subr.bf16.mxu0 0
      %359 = vmatpush2.bf16.msra.mxu0 0
      %360 = vmatprep.subr.bf16.mxu0 0
      %361 = vmatpush2.bf16.msra.mxu0 0
      %362 = vmatprep.subr.bf16.mxu0 0
      %363 = vmatpush2.bf16.msra.mxu0 0
      %364 = vmatprep.mubr.bf16.mxu0 0
      %365 = vmatmul.mubr.bf16.gmra.mxu0 %v327
      %v366 = vpop.f32.mrf.mxu0
      %v367 = vadd.f32 %v298, %v366
      %v368 = vpop.f32.mrf.mxu0
      %v369 = vadd.f32 %v302, %v368
      %v370 = vpop.f32.mrf.mxu0
      %v371 = vadd.f32 %v298, %v370
      %v372 = vpop.f32.mrf.mxu0
      %v373 = vadd.f32 %v302, %v372
      %374 = vmatprep.mubr.bf16.mxu0 0
      %375 = vmatmul.mubr.bf16.gmra.mxu0 %v330
      %v376 = vpop.f32.mrf.mxu0
      %v377 = vadd.f32 %v298, %v376
      %v378 = vpop.f32.mrf.mxu0
      %v379 = vadd.f32 %v302, %v378
      %v380 = vpop.f32.mrf.mxu0
      %v381 = vadd.f32 %v298, %v380
      %v382 = vpop.f32.mrf.mxu0
      %v383 = vadd.f32 %v302, %v382
      %384 = vdwg.mxu0
      %v385 = vmax.f32 %v367, 0.0
      %v386 = vmax.f32 %v369, 0.0
      %v387 = vmax.f32 %v371, 0.0
      %v388 = vmax.f32 %v373, 0.0
      %v389 = vmax.f32 %v377, 0.0
      %v390 = vmax.f32 %v379, 0.0
      %v391 = vmax.f32 %v381, 0.0
      %v392 = vmax.f32 %v383, 0.0
      %v393 = vpack.c.bf16 %v387, %v385
      %v394 = vpack.c.bf16 %v388, %v386
      %v395 = vpack.c.bf16 %v391, %v389
      %v396 = vpack.c.bf16 %v392, %v390
      %v397 = vld [vmem:[%s3] sm:$0xf]
      %v398 = vld [vmem:[%s3 + $0x4] sm:$0xf]
      %v399 = vld [vmem:[%s3 + $0x8] sm:$0xf]
      %v400 = vld [vmem:[%s3 + $0xc] sm:$0xf]
      %v401 = vld [vmem:[%s3 + $0x10] sm:$0xf]
      %v402 = vld [vmem:[%s3 + $0x14] sm:$0xf]
      %v403 = vld [vmem:[%s3 + $0x18] sm:$0xf]
      %v404 = vld [vmem:[%s3 + $0x1c] sm:$0xf]
      %v405 = vld [vmem:[%s3 + $0x20] sm:$0xf]
      %v406 = vld [vmem:[%s3 + $0x24] sm:$0xf]
      %v407 = vld [vmem:[%s3 + $0x28] sm:$0xf]
      %v408 = vld [vmem:[%s3 + $0x2c] sm:$0xf]
      %v409 = vld [vmem:[%s3 + $0x30] sm:$0xf]
      %v410 = vld [vmem:[%s3 + $0x34] sm:$0xf]
      %v411 = vld [vmem:[%s3 + $0x38] sm:$0xf]
      %v412 = vld [vmem:[%s3 + $0x3c] sm:$0xf]
      %v413 = vld [vmem:[%s3 + $0x40] sm:$0xf]
      %v414 = vld [vmem:[%s3 + $0x44] sm:$0xf]
      %v415 = vld [vmem:[%s3 + $0x48] sm:$0xf]
      %v416 = vld [vmem:[%s3 + $0x4c] sm:$0xf]
      %v417 = vld [vmem:[%s3 + $0x50] sm:$0xf]
      %v418 = vld [vmem:[%s3 + $0x54] sm:$0xf]
      %v419 = vld [vmem:[%s3 + $0x58] sm:$0xf]
      %v420 = vld [vmem:[%s3 + $0x5c] sm:$0xf]
      %v421 = vld [vmem:[%s3 + $0x60] sm:$0xf]
      %v422 = vld [vmem:[%s3 + $0x64] sm:$0xf]
      %v423 = vld [vmem:[%s3 + $0x68] sm:$0xf]
      %v424 = vld [vmem:[%s3 + $0x6c] sm:$0xf]
      %v425 = vld [vmem:[%s3 + $0x70] sm:$0xf]
      %v426 = vld [vmem:[%s3 + $0x74] sm:$0xf]
      %v427 = vld [vmem:[%s3 + $0x78] sm:$0xf]
      %v428 = vld [vmem:[%s3 + $0x7c] sm:$0xf]
      %v429 = vld [vmem:[%s4] sm:$0x1]
      %v431 = vlaneseq
      %v432 = vshrl.u32 %v431, 7
      %v433 = vsub.s32 0, %v432
      %v434 = vrot.slane %v429, %v433
      %v468 = vunpack.c.l.b16 %v397
      %v469 = vunpack.c.l.b16 %v398
      %v470 = vunpack.c.l.b16 %v399
      %v471 = vunpack.c.l.b16 %v400
      %v472 = vunpack.c.l.b16 %v401
      %v473 = vunpack.c.l.b16 %v402
      %v474 = vunpack.c.l.b16 %v403
      %v475 = vunpack.c.l.b16 %v404
      %v476 = vunpack.c.l.b16 %v405
      %v477 = vunpack.c.l.b16 %v406
      %v478 = vunpack.c.l.b16 %v407
      %v479 = vunpack.c.l.b16 %v408
      %v480 = vunpack.c.l.b16 %v409
      %v481 = vunpack.c.l.b16 %v410
      %v482 = vunpack.c.l.b16 %v411
      %v483 = vunpack.c.l.b16 %v412
      %v484 = vunpack.c.l.b16 %v413
      %v485 = vunpack.c.l.b16 %v414
      %v486 = vunpack.c.l.b16 %v415
      %v487 = vunpack.c.l.b16 %v416
      %v488 = vunpack.c.l.b16 %v417
      %v489 = vunpack.c.l.b16 %v418
      %v490 = vunpack.c.l.b16 %v419
      %v491 = vunpack.c.l.b16 %v420
      %v492 = vunpack.c.l.b16 %v421
      %v493 = vunpack.c.l.b16 %v422
      %v494 = vunpack.c.l.b16 %v423
      %v495 = vunpack.c.l.b16 %v424
      %v496 = vunpack.c.l.b16 %v425
      %v497 = vunpack.c.l.b16 %v426
      %v498 = vunpack.c.l.b16 %v427
      %v499 = vunpack.c.l.b16 %v428
      %v500 = vpack.c.b16 %v469, %v468
      %v501 = vpack.c.b16 %v471, %v470
      %v502 = vpack.c.b16 %v473, %v472
      %v503 = vpack.c.b16 %v475, %v474
      %v504 = vpack.c.b16 %v477, %v476
      %v505 = vpack.c.b16 %v479, %v478
      %v506 = vpack.c.b16 %v481, %v480
      %v507 = vpack.c.b16 %v483, %v482
      %v508 = vpack.c.b16 %v485, %v484
      %v509 = vpack.c.b16 %v487, %v486
      %v510 = vpack.c.b16 %v489, %v488
      %v511 = vpack.c.b16 %v491, %v490
      %v512 = vpack.c.b16 %v493, %v492
      %v513 = vpack.c.b16 %v495, %v494
      %v514 = vpack.c.b16 %v497, %v496
      %v515 = vpack.c.b16 %v499, %v498
      %532 = vmatprep.subr.bf16.mxu0 0
      %533 = vmatpush1.bf16.msra.mxu0 %v507
      %534 = vmatprep.subr.bf16.mxu0 0
      %535 = vmatpush1.bf16.msra.mxu0 %v506
      %536 = vmatprep.subr.bf16.mxu0 0
      %537 = vmatpush1.bf16.msra.mxu0 %v505
      %538 = vmatprep.subr.bf16.mxu0 0
      %539 = vmatpush1.bf16.msra.mxu0 %v504
      %540 = vmatprep.subr.bf16.mxu0 0
      %541 = vmatpush1.bf16.msra.mxu0 %v503
      %542 = vmatprep.subr.bf16.mxu0 0
      %543 = vmatpush1.bf16.msra.mxu0 %v502
      %544 = vmatprep.subr.bf16.mxu0 0
      %545 = vmatpush1.bf16.msra.mxu0 %v501
      %546 = vmatprep.subr.bf16.mxu0 0
      %547 = vmatpush1.bf16.msra.mxu0 %v500
      %548 = vmatprep.subr.bf16.mxu0 0
      %549 = vmatpush2.bf16.msra.mxu0 %v515
      %550 = vmatprep.subr.bf16.mxu0 0
      %551 = vmatpush2.bf16.msra.mxu0 %v514
      %552 = vmatprep.subr.bf16.mxu0 0
      %553 = vmatpush2.bf16.msra.mxu0 %v513
      %554 = vmatprep.subr.bf16.mxu0 0
      %555 = vmatpush2.bf16.msra.mxu0 %v512
      %556 = vmatprep.subr.bf16.mxu0 0
      %557 = vmatpush2.bf16.msra.mxu0 %v511
      %558 = vmatprep.subr.bf16.mxu0 0
      %559 = vmatpush2.bf16.msra.mxu0 %v510
      %560 = vmatprep.subr.bf16.mxu0 0
      %561 = vmatpush2.bf16.msra.mxu0 %v509
      %562 = vmatprep.subr.bf16.mxu0 0
      %563 = vmatpush2.bf16.msra.mxu0 %v508
      %564 = vmatprep.mubr.bf16.mxu0 %v394
      %565 = vmatmul.mubr.bf16.gmra.mxu0 %v393
      %v566 = vpop.f32.mrf.mxu0
      %v567 = vadd.f32 %v434, %v566
      %v568 = vpop.f32.mrf.mxu0
      %v569 = vpop.f32.mrf.mxu0
      %v570 = vadd.f32 %v434, %v569
      %v571 = vpop.f32.mrf.mxu0
      %572 = vmatprep.mubr.bf16.mxu0 %v396
      %573 = vmatmul.mubr.bf16.gmra.mxu0 %v395
      %v574 = vpop.f32.mrf.mxu0
      %v575 = vadd.f32 %v434, %v574
      %v576 = vpop.f32.mrf.mxu0
      %v577 = vpop.f32.mrf.mxu0
      %v578 = vadd.f32 %v434, %v577
      %v579 = vpop.f32.mrf.mxu0
      %580 = vdwg.mxu0
      %v581 = vmax.f32 %v567, 0.0
      %v582 = vmax.f32 %v570, 0.0
      %v583 = vmax.f32 %v575, 0.0
      %v584 = vmax.f32 %v578, 0.0
      %v585 = vpack.c.bf16 %v582, %v581
      %v586 = vpack.c.bf16 %v584, %v583
      %v587 = vld [vmem:[%s5] sm:$0xf]
      %v588 = vld [vmem:[%s5 + $0x4] sm:$0xf]
      %v589 = vld [vmem:[%s5 + $0x8] sm:$0xf]
      %v590 = vld [vmem:[%s5 + $0xc] sm:$0xf]
      %v591 = vld [vmem:[%s5 + $0x10] sm:$0xf]
      %v592 = vld [vmem:[%s5 + $0x14] sm:$0xf]
      %v593 = vld [vmem:[%s5 + $0x18] sm:$0xf]
      %v594 = vld [vmem:[%s5 + $0x1c] sm:$0xf]
      %v595 = vld [vmem:[%s5 + $0x20] sm:$0xf]
      %v596 = vld [vmem:[%s5 + $0x24] sm:$0xf]
      %v597 = vld [vmem:[%s5 + $0x28] sm:$0xf]
      %v598 = vld [vmem:[%s5 + $0x2c] sm:$0xf]
      %v599 = vld [vmem:[%s5 + $0x30] sm:$0xf]
      %v600 = vld [vmem:[%s5 + $0x34] sm:$0xf]
      %v601 = vld [vmem:[%s5 + $0x38] sm:$0xf]
      %v602 = vld [vmem:[%s5 + $0x3c] sm:$0xf]
      %v603 = vld [vmem:[%s6] sm:$0x1]
      %v605 = vlaneseq
      %v606 = vshrl.u32 %v605, 7
      %v607 = vsub.s32 0, %v606
      %v608 = vrot.slane %v603, %v607
      %v626 = vunpack.c.l.b16 %v587
      %v627 = vunpack.c.l.b16 %v588
      %v628 = vunpack.c.l.b16 %v589
      %v629 = vunpack.c.l.b16 %v590
      %v630 = vunpack.c.l.b16 %v591
      %v631 = vunpack.c.l.b16 %v592
      %v632 = vunpack.c.l.b16 %v593
      %v633 = vunpack.c.l.b16 %v594
      %v634 = vunpack.c.l.b16 %v595
      %v635 = vunpack.c.l.b16 %v596
      %v636 = vunpack.c.l.b16 %v597
      %v637 = vunpack.c.l.b16 %v598
      %v638 = vunpack.c.l.b16 %v599
      %v639 = vunpack.c.l.b16 %v600
      %v640 = vunpack.c.l.b16 %v601
      %v641 = vunpack.c.l.b16 %v602
      %v642 = vpack.c.b16 %v627, %v626
      %v643 = vpack.c.b16 %v629, %v628
      %v644 = vpack.c.b16 %v631, %v630
      %v645 = vpack.c.b16 %v633, %v632
      %v646 = vpack.c.b16 %v635, %v634
      %v647 = vpack.c.b16 %v637, %v636
      %v648 = vpack.c.b16 %v639, %v638
      %v649 = vpack.c.b16 %v641, %v640
      %658 = vmatprep.subr.bf16.mxu0 0
      %659 = vmatpush1.bf16.msra.mxu0 %v649
      %660 = vmatprep.subr.bf16.mxu0 0
      %661 = vmatpush1.bf16.msra.mxu0 %v648
      %662 = vmatprep.subr.bf16.mxu0 0
      %663 = vmatpush1.bf16.msra.mxu0 %v647
      %664 = vmatprep.subr.bf16.mxu0 0
      %665 = vmatpush1.bf16.msra.mxu0 %v646
      %666 = vmatprep.subr.bf16.mxu0 0
      %667 = vmatpush1.bf16.msra.mxu0 %v645
      %668 = vmatprep.subr.bf16.mxu0 0
      %669 = vmatpush1.bf16.msra.mxu0 %v644
      %670 = vmatprep.subr.bf16.mxu0 0
      %671 = vmatpush1.bf16.msra.mxu0 %v643
      %672 = vmatprep.subr.bf16.mxu0 0
      %673 = vmatpush1.bf16.msra.mxu0 %v642
      %674 = vmatprep.subr.bf16.mxu0 0
      %675 = vmatpush2.bf16.msra.mxu0 0
      %676 = vmatprep.subr.bf16.mxu0 0
      %677 = vmatpush2.bf16.msra.mxu0 0
      %678 = vmatprep.subr.bf16.mxu0 0
      %679 = vmatpush2.bf16.msra.mxu0 0
      %680 = vmatprep.subr.bf16.mxu0 0
      %681 = vmatpush2.bf16.msra.mxu0 0
      %682 = vmatprep.subr.bf16.mxu0 0
      %683 = vmatpush2.bf16.msra.mxu0 0
      %684 = vmatprep.subr.bf16.mxu0 0
      %685 = vmatpush2.bf16.msra.mxu0 0
      %686 = vmatprep.subr.bf16.mxu0 0
      %687 = vmatpush2.bf16.msra.mxu0 0
      %688 = vmatprep.subr.bf16.mxu0 0
      %689 = vmatpush2.bf16.msra.mxu0 0
      %690 = vmatprep.mubr.bf16.mxu0 0
      %691 = vmatmul.mubr.bf16.gmra.mxu0 %v585
      %v692 = vpop.f32.mrf.mxu0
      %v693 = vadd.f32 %v608, %v692
      %v694 = vpop.f32.mrf.mxu0
      %v695 = vpop.f32.mrf.mxu0
      %v696 = vadd.f32 %v608, %v695
      %v697 = vpop.f32.mrf.mxu0
      %698 = vmatprep.mubr.bf16.mxu0 0
      %699 = vmatmul.mubr.bf16.gmra.mxu0 %v586
      %v700 = vpop.f32.mrf.mxu0
      %v701 = vadd.f32 %v608, %v700
      %v702 = vpop.f32.mrf.mxu0
      %v703 = vpop.f32.mrf.mxu0
      %v704 = vadd.f32 %v608, %v703
      %v705 = vpop.f32.mrf.mxu0
      %706 = vdwg.mxu0
      %vm707 = vcmask 80896
      %708 = vst.msk [vmem:[%s280] sm:$0xff] %vm707, %v693
      %709 = vst.msk [vmem:[%s280 + $0x8] sm:$0xff] %vm707, %v696
      %710 = vst.msk [vmem:[%s280 + $0x10] sm:$0xff] %vm707, %v701
      %711 = vst.msk [vmem:[%s280 + $0x18] sm:$0xff] %vm707, %v704
      %s712 = smul.u32 4, %s18
      %p713 = scmp.lt.s32.totalorder %s712, 7
      %s714 = scalar_select %p713, %s712, 7
      %s715 = smul.addr %s714, 8
      %s716 = scalar_lea.vmem %s7, %s715
      // Predicated region
      $region49: #{torch_umap_forward.1} parent=47 // pred_check
        %p717 = pneg %p188
      $region50: #{torch_umap_forward.1} parent=47 // pred_check_branch
        %719 = sbr.rel (%p717) target = $region52
      $region51: #{torch_umap_forward.1} parent=47 // pred_region
        %s720 = smul.u32 4, %s18
      $region52: #{torch_umap_forward.1} parent=47 // pred_fallthru
        _
    $region48: #{torch_umap_forward.1} parent=5 // pred_fallthru
      _
    %p721 = scmp.le.s32.totalorder 2, %s13
    // Predicated region
    $region53: #{torch_umap_forward.1} parent=5 // pred_check
      %p722 = pneg %p721
    $region54: #{torch_umap_forward.1} parent=5 // pred_check_branch
      %724 = sbr.rel (%p722) target = $region56
    $region55: #{torch_umap_forward.1} parent=5 // pred_region
      %s725 = ssub.s32 %s13, 2
      // Predicated region
      $region57: #{torch_umap_forward.1} parent=55 // pred_check
        %p726 = pneg %p194
      $region58: #{torch_umap_forward.1} parent=55 // pred_check_branch
        %728 = sbr.rel (%p726) target = $region60
      $region59: #{torch_umap_forward.1} parent=55 // pred_region
        %s729 = smul.u32 4, %s19
        %p730 = scmp.lt.s32.totalorder %s729, 7
        %s731 = scalar_select %p730, %s729, 7
        %s732 = smul.addr %s731, 8
        %s733 = scalar_lea.vmem %s7, %s732
      $region60: #{torch_umap_forward.1} parent=55 // pred_fallthru
        _
    $region56: #{torch_umap_forward.1} parent=5 // pred_fallthru
      _
  $region6: #{torch_umap_forward.1} parent=0 // loop_footer
    %s17 = sadd.s32 1, %s13
  $region7: #{torch_umap_forward.1} parent=0 // loop_footer_branch
    %12 = sbr.rel target = $region3
  $region8: #{torch_umap_forward.1} parent=0 // loop_exit
    _

</llo_original>
